<compile_context>
chip_gen: v5e
topology: v5e:2x2
jax: 0.10.0
libtpu: 0.0.40
codegen_flags: <defaults>
</compile_context>

<pallas_src>
import functools

import jax
import jax.numpy as jnp
from jax.experimental import pallas as pl
from jax.experimental.pallas import tpu as pltpu


def _layernorm_kernel(alpha_ref, beta_ref, x_ref, o_ref, *, eps, d_model):
    """Row-wise LayerNorm with torch semantics (unbiased std, divide by std+eps)."""
    x = x_ref[...].astype(jnp.float32)                       # (TR, D)

    # Single-pass reductions (both lane-reductions sit on the XLU).
    # NOTE: ss - s*mean can cancel if |mean| >> spread; fine for typical
    # activations, revisit (shifted two-pass) if tolerance issues appear.
    s = jnp.sum(x, axis=-1, keepdims=True)                   # (TR, 1)
    ss = jnp.sum(x * x, axis=-1, keepdims=True)              # (TR, 1)
    mean = s * (1.0 / d_model)

    # torch .std() default is unbiased (divide by d_model - 1).
    var = (ss - s * mean) * (1.0 / (d_model - 1))
    std = jnp.sqrt(jnp.maximum(var, 0.0))

    # Reciprocal on the EUP slot; one Newton step (column-only VPU work)
    # restores full f32 precision so the approx flag costs nothing numerically.
    d = std + eps
    inv = pl.reciprocal(d, approx=True)
    inv = inv * (2.0 - d * inv)

    # Fold alpha into the scale and (beta - mean*scale) into the shift:
    # full-tile work is o = x*scale + shift (one mul + one add).
    scale = alpha_ref[0] * inv                                # (TR, 1)
    shift = beta_ref[0] - mean * scale                        # (TR, 1)
    o_ref[...] = (x * scale + shift).astype(o_ref.dtype)


def _vmem_capacity_bytes():
    """Best-effort physical VMEM size; conservative 64 MiB (v7x) fallback."""
    cap = 0
    try:
        info = pltpu.get_tpu_info()
        for attr in ("vmem_capacity_bytes", "vmem_size_bytes", "vmem_bytes"):
            v = getattr(info, attr, None)
            if isinstance(v, int) and v > 0:
                cap = v
                break
    except Exception:
        cap = 0
    return max(cap, 64 << 20)


def _choose_row_tile(R, D, in_itemsize, out_itemsize, vmem_cap):
    """Byte-based row tile.

    Big enough to amortize the ~0.35us per-step overhead (>= ~1-4 MiB input
    block), small enough that double-buffered in/out + ~3 f32 temps fit a
    per-generation VMEM budget, and leaving >= 2-4 grid steps for pipelining
    (and megacore sharding on v7x) whenever R allows.
    """
    if R <= 8:
        return R  # full-extent block satisfies the (8,128) rule

    # Target input-block bytes: larger on 128 MiB VMEM parts (v5e/v6e).
    target_in_bytes = (4 << 20) if vmem_cap >= (100 << 20) else (2 << 20)
    tr = max(8, (target_in_bytes // max(1, D * in_itemsize)) // 8 * 8)

    # Per-row VMEM working set: double-buffered input + double-buffered output
    # + ~3 materialized f32 intermediates (f32 copy, x*x, normalized product).
    per_row = 2 * D * in_itemsize + 2 * D * out_itemsize + 3 * D * 4
    budget = min(24 << 20, vmem_cap // 3)
    tr = min(tr, max(8, (budget // per_row) // 8 * 8))

    # Keep >= 4 grid steps (>= 2 per TensorCore on v7x) when R allows,
    # otherwise at least 2 so DMA-in / compute / DMA-out overlap.
    if R >= 4 * 8:
        tr = min(tr, max(8, (R // 4) // 8 * 8))
    else:
        tr = min(tr, max(8, (R // 2) // 8 * 8))

    return min(tr, R)


def layer_norm_pallas(x, alpha, beta, *, eps=1e-6):
    """x: (..., D). alpha/beta: (1,) f32 scalars (as in the PyTorch module)."""
    orig_shape = x.shape
    D = orig_shape[-1]
    x2 = x.reshape(-1, D)
    R = x2.shape[0]

    in_itemsize = x2.dtype.itemsize
    out_itemsize = in_itemsize
    vmem_cap = _vmem_capacity_bytes()
    tr = _choose_row_tile(R, D, in_itemsize, out_itemsize, vmem_cap)
    grid = (pl.cdiv(R, tr),)

    # VMEM limit derived from the tile (double-buffered I/O + f32 temps + slack),
    # never exceeding half the physical VMEM of this generation.
    per_row = 2 * D * in_itemsize + 2 * D * out_itemsize + 3 * D * 4
    needed = per_row * tr + (2 << 20)
    vmem_limit = int(min(vmem_cap // 2, max(32 << 20, needed)))

    out = pl.pallas_call(
        functools.partial(_layernorm_kernel, eps=eps, d_model=D),
        out_shape=jax.ShapeDtypeStruct((R, D), x.dtype),
        grid=grid,
        in_specs=[
            pl.BlockSpec(memory_space=pltpu.MemorySpace.SMEM),   # alpha (1,)
            pl.BlockSpec(memory_space=pltpu.MemorySpace.SMEM),   # beta  (1,)
            pl.BlockSpec((tr, D), lambda i: (i, 0)),             # x row tile
        ],
        out_specs=pl.BlockSpec((tr, D), lambda i: (i, 0)),
        compiler_params=pltpu.CompilerParams(
            # Independent row tiles -> parallel (2x on v7x, harmless elsewhere).
            dimension_semantics=("parallel",),
            vmem_limit_bytes=vmem_limit,
        ),
    )(alpha, beta, x2)

    return out.reshape(orig_shape)


def encoder_forward(x, mask, layers, alpha, beta, *, eps=1e-6):
    """Encoder.forward: run each layer(x, mask), then LayerNormalization."""
    # TODO(synk): the EncoderBlock layers are arbitrary nn.Modules in the spec
    # (not defined there); they are applied here as user-supplied JAX callables.
    # The biggest remaining win is fusing this final LayerNorm into the last
    # layer's residual-add epilogue to save one full HBM round-trip of x.
    for layer in layers:
        x = layer(x, mask)
    return layer_norm_pallas(x, alpha, beta, eps=eps)


if __name__ == "__main__":
    key = jax.random.PRNGKey(0)

    B, S, D = 2, 8, 128        # batch=2, seq=8, d_model=128 (lane-aligned)
    x = jax.random.normal(key, (B, S, D), dtype=jnp.float32)
    mask = jnp.ones((B, 1, S, S), dtype=jnp.float32)

    # LayerNormalization parameters exactly as in __init__: ones(1), zeros(1).
    alpha = jnp.ones((1,), dtype=jnp.float32)
    beta = jnp.zeros((1,), dtype=jnp.float32)

    # Placeholder layer stack (identity) — see TODO(synk) above.
    layers = (lambda x, mask: x,)

    out = encoder_forward(x, mask, layers, alpha, beta)
    jax.block_until_ready(out)

    # Reference check against torch-style LayerNormalization semantics.
    mean = x.mean(axis=-1, keepdims=True)
    std = jnp.std(x, axis=-1, keepdims=True, ddof=1)      # unbiased, like torch
    ref = alpha[0] * (x - mean) / (std + 1e-6) + beta[0]

    assert out.shape == (B, S, D) and out.dtype == jnp.float32
    assert float(jnp.max(jnp.abs(out - ref))) < 1e-3

    print("KERNEL_OK")
</pallas_src>

<mosaic_0001>
module attributes {stable_mosaic.version = 11 : i64} {
  func.func @_layernorm_kernel(%arg0: i32, %arg1: memref<1xf32, #tpu.memory_space<smem>>, %arg2: memref<1xf32, #tpu.memory_space<smem>>, %arg3: memref<8x128xf32, #tpu.memory_space<vmem>>, %arg4: memref<8x128xf32, #tpu.memory_space<vmem>>) attributes {dimension_semantics = [#tpu.dimension_semantics<parallel>], iteration_bounds = array<i64: 2>, scalar_prefetch = 0 : i64, scratch_operands = 0 : i64, tpu.core_type = #tpu.core_type<tc>, window_params = [{transform_indices = @transform_0, window_bounds = array<i64: 1>}, {transform_indices = @transform_1, window_bounds = array<i64: 1>}, {transform_indices = @transform_2, window_bounds = array<i64: 8, 128>}, {transform_indices = @transform_3, window_bounds = array<i64: 8, 128>}]} {
    %c0 = arith.constant 0 : index
    %c0_0 = arith.constant 0 : index
    %0 = vector.load %arg3[%c0, %c0_0] : memref<8x128xf32, #tpu.memory_space<vmem>>, vector<8x128xf32>
    %cst = arith.constant dense<0.000000e+00> : vector<8xf32>
    %1 = vector.multi_reduction <add>, %0, %cst [1] : vector<8x128xf32> to vector<8xf32>
    %2 = vector.shape_cast %1 : vector<8xf32> to vector<8x1xf32>
    %3 = arith.mulf %0, %0 : vector<8x128xf32>
    %cst_1 = arith.constant dense<0.000000e+00> : vector<8xf32>
    %4 = vector.multi_reduction <add>, %3, %cst_1 [1] : vector<8x128xf32> to vector<8xf32>
    %5 = vector.shape_cast %4 : vector<8xf32> to vector<8x1xf32>
    %cst_2 = arith.constant 7.812500e-03 : f32
    %6 = vector.broadcast %cst_2 : f32 to vector<8x1xf32>
    %7 = arith.mulf %2, %6 : vector<8x1xf32>
    %8 = arith.mulf %2, %7 : vector<8x1xf32>
    %9 = arith.subf %5, %8 : vector<8x1xf32>
    %cst_3 = arith.constant 0.00787401571 : f32
    %10 = vector.broadcast %cst_3 : f32 to vector<8x1xf32>
    %11 = arith.mulf %9, %10 : vector<8x1xf32>
    %cst_4 = arith.constant 0.000000e+00 : f32
    %12 = vector.broadcast %cst_4 : f32 to vector<8x1xf32>
    %13 = arith.maximumf %11, %12 : vector<8x1xf32>
    %14 = math.sqrt %13 : vector<8x1xf32>
    %cst_5 = arith.constant 9.99999997E-7 : f32
    %15 = vector.broadcast %cst_5 : f32 to vector<8x1xf32>
    %16 = arith.addf %14, %15 : vector<8x1xf32>
    %17 = tpu.reciprocal %16 {approx = true} : vector<8x1xf32> -> vector<8x1xf32>
    %18 = arith.mulf %16, %17 : vector<8x1xf32>
    %cst_6 = arith.constant 2.000000e+00 : f32
    %19 = vector.broadcast %cst_6 : f32 to vector<8x1xf32>
    %20 = arith.subf %19, %18 : vector<8x1xf32>
    %21 = arith.mulf %17, %20 : vector<8x1xf32>
    %c0_7 = arith.constant 0 : index
    %22 = memref.load %arg1[%c0_7] : memref<1xf32, #tpu.memory_space<smem>>
    %23 = vector.broadcast %22 : f32 to vector<8x1xf32>
    %24 = arith.mulf %23, %21 : vector<8x1xf32>
    %c0_8 = arith.constant 0 : index
    %25 = memref.load %arg2[%c0_8] : memref<1xf32, #tpu.memory_space<smem>>
    %26 = arith.mulf %7, %24 : vector<8x1xf32>
    %27 = vector.broadcast %25 : f32 to vector<8x1xf32>
    %28 = arith.subf %27, %26 : vector<8x1xf32>
    %29 = vector.broadcast %24 : vector<8x1xf32> to vector<8x128xf32>
    %30 = arith.mulf %0, %29 : vector<8x128xf32>
    %31 = vector.broadcast %28 : vector<8x1xf32> to vector<8x128xf32>
    %32 = arith.addf %30, %31 : vector<8x128xf32>
    %c0_9 = arith.constant 0 : index
    %c0_10 = arith.constant 0 : index
    %33 = vector.load %arg4[%c0_9, %c0_10] : memref<8x128xf32, #tpu.memory_space<vmem>>, vector<8x128xf32>
    tpu.vector_store %arg4[%c0_9, %c0_10], %32 {strides = array<i32>} : memref<8x128xf32, #tpu.memory_space<vmem>>, vector<8x128xf32>,
    return
  }
  func.func @transform_0(%arg0: i32) -> i32 {
    %c0_i32 = arith.constant 0 : i32
    %c0_i32_0 = arith.constant 0 : i32
    return %c0_i32 : i32
  }
  func.func @transform_1(%arg0: i32) -> i32 {
    %c0_i32 = arith.constant 0 : i32
    %c0_i32_0 = arith.constant 0 : i32
    return %c0_i32 : i32
  }
  func.func @transform_2(%arg0: i32) -> (i32, i32) {
    %c0_i32 = arith.constant 0 : i32
    %c0_i32_0 = arith.constant 0 : i32
    return %arg0, %c0_i32 : i32, i32
  }
  func.func @transform_3(%arg0: i32) -> (i32, i32) {
    %c0_i32 = arith.constant 0 : i32
    %c0_i32_0 = arith.constant 0 : i32
    return %arg0, %c0_i32 : i32, i32
  }
}

</mosaic_0001>

<llo_original>
// kernel: tpu_custom_call.1
$region0: #{tpu_custom_call.1}
  #allocation0 [shape = 'u32[]', space=smem, size = 0x4, offset = 0x4, fixed_abs, tag = 'smem constant byte address 0x4 - core index']
  #allocation1 [shape = 'u32[72,128]{1,0:T(1,128)}', space=vmem, size = 0x9000, scoped, tag = 'internal scratch']
  #allocation2 [shape = 'f32[1]{0:T(128)S(6)}', space=smem, size = 0x200, scoped, tag = 'scoped memory for tpu_custom_call.1']
  #allocation3 [shape = 'f32[1]{0:T(128)S(6)}', space=smem, size = 0x200, scoped, tag = 'scoped memory for tpu_custom_call.1']
  %s0 = inlined_call_operand.<no memory space> [shape: f32[1], index: 0, kind: input, shape index: {}]
  %s1 = inlined_call_operand.<no memory space> [shape: f32[1], index: 1, kind: input, shape index: {}]
  %s2 = inlined_call_operand.hbm [shape: f32[16,128], index: 2, kind: input, shape index: {}]
  %s3 = inlined_call_operand.hbm [shape: f32[16,128], index: 3, kind: output, shape index: {}]
  %s4 = sld [smem:[#allocation0]]
  $region49: #{tpu_custom_call.1} parent=0
    _
  %s6 = ssub.s32 1, %s4
  %s7 = scalar_select 0, %s6, %s4
  %8 = sst [smem:[#allocation2]] %s0
  %9 = sst [smem:[#allocation3]] %s1
  $region1: #{tpu_custom_call.1} parent=0
    #allocation4 [shape = 'u8[8192]{0}', space=vmem, size = 0x2000, scoped, tag = 'input window, operand 2']
    #allocation5 [shape = 's32[2]{0}', space=sflag, size = 0x8, scoped, tag = 'scoped memory for tpu_custom_call.1']
    #allocation6 [shape = 's32[2]{0}', space=sflag, size = 0x8, scoped, tag = 'scoped memory for tpu_custom_call.1']
    #allocation7 [shape = 'u8[8192]{0}', space=vmem, size = 0x2000, scoped, tag = 'output window, operand 0']
    %10 = vsyncpa [#allocation5], 0
    %s11 = scalar_lea.sflag [#allocation5], 1
    %12 = vsyncpa %s11, 0
    %13 = vsyncpa [#allocation6], 0
    %s14 = scalar_lea.sflag [#allocation6], 1
    %15 = vsyncpa %s14, 0
    loop: start=0, step=1, limit=4
    $region2: #{tpu_custom_call.1} parent=1 // loop_pre_header
      _
    $region3: #{tpu_custom_call.1} parent=1 // loop_header
      %s17 = sphi 0, %s21
      %p18 = scmp.ge.s32.totalorder %s17, 4
      %s25 = sphi 0, %s25
      %s27 = sphi 0, %s25
      %s28 = sphi 0, %s27
      %s42 = sphi 0, %s28
      %s46 = sphi 0, %s46
      %s48 = sphi 0, %s46
      %s49 = sphi 0, %s48
      %s63 = sphi 0, %s49
      %s69 = sphi 0, %s71
      %s72 = sphi 0, %s69
      %s73 = sphi 0, %s72
      %s89 = sphi 0, %s73
      %s95 = sphi 0, %s97
      %s98 = sphi 0, %s95
      %s99 = sphi 0, %s98
      %s115 = sphi 0, %s99
    $region4: #{tpu_custom_call.1} parent=1 // loop_header_branch
      %20 = sbr.rel (%p18) target = $region8
    $region5: #{tpu_custom_call.1} parent=1 // loop_body
      %s22 = ssub.s32 %s17, 1
      %s23 = ssub.s32 %s17, 2
      %s24 = sadd.s32 %s17, 1
      %s26 = sadd.s32 %s25, 1
      %p29 = scmp.eq.s32.totalorder %s17, 1
      %p30 = scmp.ne.s32.totalorder %s25, %s27
      %p31 = scmp.eq.s32.totalorder %s17, 0
      %p32 = por %p30, %p31
      %p33 = scmp.ne.s32.totalorder %s25, %s27
      %p34 = scmp.eq.s32.totalorder %s22, 1
      %p35 = por %p33, %p34
      %p36 = scmp.ne.s32.totalorder %s27, %s28
      %p37 = scmp.eq.s32.totalorder %s22, 0
      %p38 = por %p36, %p37
      %p39 = scmp.ne.s32.totalorder %s27, %s28
      %p40 = scmp.eq.s32.totalorder %s23, 1
      %p41 = por %p39, %p40
      %p43 = scmp.ne.s32.totalorder %s28, %s42
      %p44 = scmp.eq.s32.totalorder %s23, 0
      %p45 = por %p43, %p44
      %s47 = sadd.s32 %s46, 1
      %p50 = scmp.eq.s32.totalorder %s17, 1
      %p51 = scmp.ne.s32.totalorder %s46, %s48
      %p52 = scmp.eq.s32.totalorder %s17, 0
      %p53 = por %p51, %p52
      %p54 = scmp.ne.s32.totalorder %s46, %s48
      %p55 = scmp.eq.s32.totalorder %s22, 1
      %p56 = por %p54, %p55
      %p57 = scmp.ne.s32.totalorder %s48, %s49
      %p58 = scmp.eq.s32.totalorder %s22, 0
      %p59 = por %p57, %p58
      %p60 = scmp.ne.s32.totalorder %s48, %s49
      %p61 = scmp.eq.s32.totalorder %s23, 1
      %p62 = por %p60, %p61
      %p64 = scmp.ne.s32.totalorder %s49, %s63
      %p65 = scmp.eq.s32.totalorder %s23, 0
      %p66 = por %p64, %p65
      %s67 = ssub.s32 %s17, %s24
      %p68 = scmp.eq.s32.totalorder %s67, 0
      %s70 = sadd.s32 %s69, 1
      %s71 = scalar_select %p68, %s69, %s70
      %p74 = pneg %p68
      %p75 = scmp.eq.s32.totalorder %s17, 1
      %p76 = por %p74, %p75
      %p77 = scmp.ne.s32.totalorder %s69, %s72
      %p78 = scmp.eq.s32.totalorder %s17, 0
      %p79 = por %p77, %p78
      %p80 = scmp.ne.s32.totalorder %s69, %s72
      %p81 = scmp.eq.s32.totalorder %s22, 1
      %p82 = por %p80, %p81
      %p83 = scmp.ne.s32.totalorder %s72, %s73
      %p84 = scmp.eq.s32.totalorder %s22, 0
      %p85 = por %p83, %p84
      %p86 = scmp.ne.s32.totalorder %s72, %s73
      %p87 = scmp.eq.s32.totalorder %s23, 1
      %p88 = por %p86, %p87
      %p90 = scmp.ne.s32.totalorder %s73, %s89
      %p91 = scmp.eq.s32.totalorder %s23, 0
      %p92 = por %p90, %p91
      %s93 = ssub.s32 %s17, %s24
      %p94 = scmp.eq.s32.totalorder %s93, 0
      %s96 = sadd.s32 %s95, 1
      %s97 = scalar_select %p94, %s95, %s96
      %p100 = pneg %p94
      %p101 = scmp.eq.s32.totalorder %s17, 1
      %p102 = por %p100, %p101
      %p103 = scmp.ne.s32.totalorder %s95, %s98
      %p104 = scmp.eq.s32.totalorder %s17, 0
      %p105 = por %p103, %p104
      %p106 = scmp.ne.s32.totalorder %s95, %s98
      %p107 = scmp.eq.s32.totalorder %s22, 1
      %p108 = por %p106, %p107
      %p109 = scmp.ne.s32.totalorder %s98, %s99
      %p110 = scmp.eq.s32.totalorder %s22, 0
      %p111 = por %p109, %p110
      %p112 = scmp.ne.s32.totalorder %s98, %s99
      %p113 = scmp.eq.s32.totalorder %s23, 1
      %p114 = por %p112, %p113
      %p116 = scmp.ne.s32.totalorder %s99, %s115
      %p117 = scmp.eq.s32.totalorder %s23, 0
      %p118 = por %p116, %p117
      %p119 = scmp.le.s32.totalorder 1, %s17
      %p120 = scmp.lt.s32.totalorder %s17, 3
      %p121 = pnand %p119, %p120
      %p122 = pneg %p121
      // Predicated region
      $region9: #{tpu_custom_call.1} parent=5 // pred_check
        _
      $region10: #{tpu_custom_call.1} parent=5 // pred_check_branch
        %124 = sbr.rel (%p121) target = $region12
      $region11: #{tpu_custom_call.1} parent=5 // pred_region
        %s125 = ssub.s32 %s17, 1
        // Predicated region
        $region13: #{tpu_custom_call.1} parent=11 // pred_check
          %p126 = pneg %p38
        $region14: #{tpu_custom_call.1} parent=11 // pred_check_branch
          %128 = sbr.rel (%p126) target = $region16
        $region15: #{tpu_custom_call.1} parent=11 // pred_region
          _
        $region16: #{tpu_custom_call.1} parent=11 // pred_fallthru
          _
        // Predicated region
        $region17: #{tpu_custom_call.1} parent=11 // pred_check
          %p129 = pneg %p59
        $region18: #{tpu_custom_call.1} parent=11 // pred_check_branch
          %131 = sbr.rel (%p129) target = $region20
        $region19: #{tpu_custom_call.1} parent=11 // pred_region
          _
        $region20: #{tpu_custom_call.1} parent=11 // pred_fallthru
          _
      $region12: #{tpu_custom_call.1} parent=5 // pred_fallthru
        _
      %p132 = scmp.lt.s32.totalorder %s17, 2
      // Predicated region
      $region21: #{tpu_custom_call.1} parent=5 // pred_check
        %p133 = pneg %p132
      $region22: #{tpu_custom_call.1} parent=5 // pred_check_branch
        %135 = sbr.rel (%p133) target = $region24
      $region23: #{tpu_custom_call.1} parent=5 // pred_region
        // Predicated region
        $region25: #{tpu_custom_call.1} parent=23 // pred_check
          %p136 = pneg %p79
        $region26: #{tpu_custom_call.1} parent=23 // pred_check_branch
          %138 = sbr.rel (%p136) target = $region28
        $region27: #{tpu_custom_call.1} parent=23 // pred_region
          %s139 = sand.u32 %s69, 1
          %s140 = scalar_lea.sflag [#allocation5], %s139
          %s141 = sand.u32 %s69, 1
          %s142 = smul.addr %s141, 8
          %s143 = scalar_lea.vmem [#allocation4], %s142
          %145 = vsyncadd %s140, 0
          %s146 = smul.addr %s17, 8
          %s147 = scalar_lea.hbm %s2, %s146
          %s149 = sshll.u32 %s147, 4
          %s150 = int_to_ptr.hbm [resolvable:$true] %s149
          %s151 = sshll.u32 %s143, 4
          %s152 = int_to_ptr.vmem [resolvable:$true] %s151
          %154 = dma.hbm_to_vmem [thread:$0]  %s150, 128, %s152, %s140
        $region28: #{tpu_custom_call.1} parent=23 // pred_fallthru
          _
      $region24: #{tpu_custom_call.1} parent=5 // pred_fallthru
        _
      %p155 = scmp.le.s32.totalorder 1, %s17
      %p156 = scmp.lt.s32.totalorder %s17, 3
      %p157 = pnand %p155, %p156
      %p158 = pneg %p157
      // Predicated region
      $region29: #{tpu_custom_call.1} parent=5 // pred_check
        _
      $region30: #{tpu_custom_call.1} parent=5 // pred_check_branch
        %160 = sbr.rel (%p157) target = $region32
      $region31: #{tpu_custom_call.1} parent=5 // pred_region
        %s161 = ssub.s32 %s17, 1
        %s162 = sand.u32 %s72, 1
        %s163 = scalar_lea.sflag [#allocation5], %s162
        %s164 = sand.u32 %s72, 1
        %s165 = smul.addr %s164, 8
        %s166 = scalar_lea.vmem [#allocation4], %s165
        // Predicated region
        $region33: #{tpu_custom_call.1} parent=31 // pred_check
          %p167 = pneg %p85
        $region34: #{tpu_custom_call.1} parent=31 // pred_check_branch
          %169 = sbr.rel (%p167) target = $region36
        $region35: #{tpu_custom_call.1} parent=31 // pred_region
          %171 = dma.done %s163, 128
        $region36: #{tpu_custom_call.1} parent=31 // pred_fallthru
          _
        %p172 = pneg %p38
        %p173 = pneg %p35
        %p174 = pneg %p59
        %p175 = pneg %p56
        %s176 = sand.u32 %s72, 1
        %s177 = scalar_lea.sflag [#allocation5], %s176
        %s178 = sand.u32 %s72, 1
        %s179 = smul.addr %s178, 8
        %s180 = scalar_lea.vmem [#allocation4], %s179
        %p181 = pneg %p85
        %p182 = pneg %p82
        %p183 = pneg %p111
        %p184 = pneg %p108
        %s185 = sand.u32 %s98, 1
        %s186 = scalar_lea.sflag [#allocation6], %s185
        %s187 = sand.u32 %s98, 1
        %s188 = smul.addr %s187, 8
        %s189 = scalar_lea.vmem [#allocation7], %s188
        %v190 = vld [vmem:[%s166] sm:$0xff]
        %191 = vadd.xlane.f32.xlu0 %v190
        %v192 = vpop.xlane.xlu0 %191
        %v193 = vmul.f32 %v190, %v190
        %194 = vadd.xlane.f32.xlu0 %v193
        %v195 = vpop.xlane.xlu0 %194
        %v196 = vmul.f32 %v192, 0.0078125
        %v197 = vmul.f32 %v192, %v196
        %v198 = vsub.f32 %v195, %v197
        %v199 = vmul.f32 %v198, 0.007874016
        %v200 = vmax.f32 %v199, 0.0
        %v201 = vrsqrt.pop %v200
        %v202 = vmul.f32 %v201, %v200
        %v203 = vmul.f32 %v202, %v201
        %v204 = vmul.f32 0.5, %v203
        %v205 = vsub.f32 1.5, %v204
        %v206 = vmul.f32 %v201, %v205
        %v207 = vmul.f32 %v200, %v206
        %vm208 = vcmp.eq.f32.partialorder %v200, inf
        %v209 = vsel %vm208, %v200, %v207
        %vm210 = vcmp.eq.f32.partialorder %v200, 0.0
        %v211 = vand.u32 %v200, 2147483648
        %v212 = vsel %vm210, %v211, %v209
        %v213 = vadd.f32 %v212, 1e-06
        %v214 = vrcp.pop %v213
        %v215 = vmul.f32 %v213, %v214
        %v216 = vsub.f32 2.0, %v215
        %v217 = vmul.f32 %v214, %v216
        %s218 = sld [smem:[#allocation2]]
        %v219 = vstv %s218
        %v220 = vmul.f32 %v219, %v217
        %s221 = sld [smem:[#allocation3]]
        %v222 = vmul.f32 %v196, %v220
        %v223 = vstv %s221
        %v224 = vsub.f32 %v223, %v222
        %v225 = vmul.f32 %v190, %v220
        %v226 = vadd.f32 %v225, %v224
        %227 = vst [vmem:[%s189] sm:$0xff] %v226
        %s228 = sand.u32 %s98, 1
        %s229 = scalar_lea.sflag [#allocation6], %s228
        %s230 = sand.u32 %s98, 1
        %s231 = smul.addr %s230, 8
        %s232 = scalar_lea.vmem [#allocation7], %s231
        // Predicated region
        $region37: #{tpu_custom_call.1} parent=31 // pred_check
          %p233 = pneg %p108
        $region38: #{tpu_custom_call.1} parent=31 // pred_check_branch
          %235 = sbr.rel (%p233) target = $region40
        $region39: #{tpu_custom_call.1} parent=31 // pred_region
          %237 = vsyncadd %s229, 0
          %s238 = smul.addr %s22, 8
          %s239 = scalar_lea.hbm %s3, %s238
          %s241 = sshll.u32 %s232, 4
          %s242 = int_to_ptr.vmem [resolvable:$true] %s241
          %s243 = sshll.u32 %s239, 4
          %s244 = int_to_ptr.hbm [resolvable:$true] %s243
          %246 = dma.vmem_to_hbm [thread:$0]  %s242, 128, %s244, %s229
        $region40: #{tpu_custom_call.1} parent=31 // pred_fallthru
          _
      $region32: #{tpu_custom_call.1} parent=5 // pred_fallthru
        _
      %p247 = scmp.le.s32.totalorder 2, %s17
      // Predicated region
      $region41: #{tpu_custom_call.1} parent=5 // pred_check
        %p248 = pneg %p247
      $region42: #{tpu_custom_call.1} parent=5 // pred_check_branch
        %250 = sbr.rel (%p248) target = $region44
      $region43: #{tpu_custom_call.1} parent=5 // pred_region
        %s251 = ssub.s32 %s17, 2
        // Predicated region
        $region45: #{tpu_custom_call.1} parent=43 // pred_check
          %p252 = pneg %p114
        $region46: #{tpu_custom_call.1} parent=43 // pred_check_branch
          %254 = sbr.rel (%p252) target = $region48
        $region47: #{tpu_custom_call.1} parent=43 // pred_region
          %s255 = sand.u32 %s99, 1
          %s256 = scalar_lea.sflag [#allocation6], %s255
          %s257 = sand.u32 %s99, 1
          %s258 = smul.addr %s257, 8
          %s259 = scalar_lea.vmem [#allocation7], %s258
          %261 = dma.done %s256, 128
        $region48: #{tpu_custom_call.1} parent=43 // pred_fallthru
          _
      $region44: #{tpu_custom_call.1} parent=5 // pred_fallthru
        _
    $region6: #{tpu_custom_call.1} parent=1 // loop_footer
      %s21 = sadd.s32 1, %s17
    $region7: #{tpu_custom_call.1} parent=1 // loop_footer_branch
      %16 = sbr.rel target = $region3
    $region8: #{tpu_custom_call.1} parent=1 // loop_exit
      _
    %262 = vsyncpa [#allocation5], 1
    %s263 = scalar_lea.sflag [#allocation5], 1
    %264 = vsyncpa %s263, 1
    %265 = vsyncpa [#allocation6], 1
    %s266 = scalar_lea.sflag [#allocation6], 1
    %267 = vsyncpa %s266, 1

</llo_original>
